<compile_context>
chip_gen: v5e
topology: v5e:2x2
jax: 0.10.0
libtpu: 0.0.40
codegen_flags: <defaults>
</compile_context>

<pallas_src>
import functools

import jax
import jax.numpy as jnp
from jax.experimental import pallas as pl
from jax.experimental.pallas import tpu as pltpu


def _avgpool_kernel(x_ref, o_ref, *, k1, k2, ho, wo,
                    pad_t, pad_b, pad_l, pad_r):
    """x_ref: (H, W, C) lane-dense block; o_ref: (OH, OW, C) block.

    OH/OW already include the fused replicate padding (OH==H, OW==W when
    auto_pad=True; OH==Ho, OW==Wo otherwise, with all pads == 0).
    """
    c = x_ref.shape[-1]
    x = x_ref[...].astype(jnp.float32)

    # Separable stride-1 box sum: row (W) window sum, then column (H) window
    # sum. O(k1 + k2 - 2) adds; no zero-init add (start from the first shift).
    rs = x[:, 0:wo, :]
    for j in range(1, k2):
        rs = rs + x[:, j:j + wo, :]
    acc = rs[0:ho, :, :]
    for i in range(1, k1):
        acc = acc + rs[i:i + ho, :, :]

    interior = (acc * (1.0 / (k1 * k2))).astype(o_ref.dtype)

    # Interior write (valid box-average region).
    o_ref[pad_t:pad_t + ho, pad_l:pad_l + wo, :] = interior

    # Fused replicate ("edge") padding: left/right columns first, then
    # full-width top/bottom rows (so corners inherit the corner value),
    # exactly matching F.pad(..., mode='replicate').
    if pad_l:
        o_ref[pad_t:pad_t + ho, 0:pad_l, :] = jnp.broadcast_to(
            interior[:, 0:1, :], (ho, pad_l, c))
    if pad_r:
        o_ref[pad_t:pad_t + ho, pad_l + wo:pad_l + wo + pad_r, :] = (
            jnp.broadcast_to(interior[:, wo - 1:wo, :], (ho, pad_r, c)))
    ow = pad_l + wo + pad_r
    if pad_t:
        top_row = o_ref[pad_t:pad_t + 1, :, :]
        o_ref[0:pad_t, :, :] = jnp.broadcast_to(top_row, (pad_t, ow, c))
    if pad_b:
        bot_row = o_ref[pad_t + ho - 1:pad_t + ho, :, :]
        o_ref[pad_t + ho:pad_t + ho + pad_b, :, :] = jnp.broadcast_to(
            bot_row, (pad_b, ow, c))


def avg_pool2d(x, kernel_size=(2, 2), auto_pad=True):
    """Matches AvgPool2d.forward (fast_imp=False path) for NCHW input."""
    n, c, h, w = x.shape
    k1 = min(h, kernel_size[0])
    k2 = min(w, kernel_size[1])

    if kernel_size[0] >= h and kernel_size[1] >= w:
        # adaptive_avg_pool2d(x, 1) early-return (same shape semantics as torch).
        return jnp.mean(x, axis=(2, 3), keepdims=True)

    ho, wo = h - k1 + 1, w - k2 + 1
    if auto_pad:
        pad_l = (w - wo) // 2
        pad_r = (w - wo + 1) // 2
        pad_t = (h - ho) // 2
        pad_b = (h - ho + 1) // 2
        out_h, out_w = h, w
    else:
        pad_l = pad_r = pad_t = pad_b = 0
        out_h, out_w = ho, wo

    nc = n * c
    # Channels-last, lane-dense layout: (H, W, N*C). Layout plumbing in XLA.
    x_cl = jnp.transpose(x.reshape(nc, h, w), (1, 2, 0))

    # --- choose the per-step channel tile ---
    LANE = 128
    if nc <= LANE:
        # Whole tensor in a single block (tiny case, e.g. the test input).
        c_tile = nc
    else:
        itemsize = jnp.dtype(x.dtype).itemsize
        # Double-buffered in/out blocks + in-kernel f32 temporaries, per 128
        # channels. Budget leaves headroom inside v7x's 32 MiB scoped VMEM.
        bytes_per_128 = LANE * (
            2 * (h * w + out_h * out_w) * itemsize + 3 * h * w * 4)
        vmem_budget = 24 * 1024 * 1024
        max_units = max(1, vmem_budget // bytes_per_128)
        total_units = -(-nc // LANE)
        # Keep >= 2 grid steps so both v7x TensorCores get work.
        units = min(max_units, max(1, -(-total_units // 2)))
        c_tile = units * LANE
    grid_steps = -(-nc // c_tile)

    kernel = functools.partial(
        _avgpool_kernel, k1=k1, k2=k2, ho=ho, wo=wo,
        pad_t=pad_t, pad_b=pad_b, pad_l=pad_l, pad_r=pad_r)

    out_cl = pl.pallas_call(
        kernel,
        out_shape=jax.ShapeDtypeStruct((out_h, out_w, nc), x.dtype),
        grid_spec=pltpu.PrefetchScalarGridSpec(
            num_scalar_prefetch=0,
            grid=(grid_steps,),
            in_specs=[pl.BlockSpec((h, w, c_tile), lambda i: (0, 0, i))],
            out_specs=pl.BlockSpec((out_h, out_w, c_tile), lambda i: (0, 0, i)),
        ),
        compiler_params=pltpu.CompilerParams(
            dimension_semantics=("parallel",)),
    )(x_cl)

    out = jnp.transpose(out_cl, (2, 0, 1)).reshape(n, c, out_h, out_w)
    return out


def _reference(x, kernel_size=(2, 2), auto_pad=True):
    """Pure-JAX reference mirroring the PyTorch integral-image code."""
    n, c, h, w = x.shape
    k1 = min(h, kernel_size[0])
    k2 = min(w, kernel_size[1])
    s = jnp.cumsum(jnp.cumsum(x, axis=-1), axis=-2)
    s = jnp.pad(s, ((0, 0), (0, 0), (1, 0), (1, 0)))
    s1 = s[:, :, :-k1, :-k2]
    s2 = s[:, :, :-k1, k2:]
    s3 = s[:, :, k1:, :-k2]
    s4 = s[:, :, k1:, k2:]
    out = (s4 + s1 - s2 - s3) / (k1 * k2)
    if auto_pad:
        _h, _w = out.shape[2:]
        pad_l = (w - _w) // 2
        pad_r = (w - _w + 1) // 2
        pad_t = (h - _h) // 2
        pad_b = (h - _h + 1) // 2
        out = jnp.pad(out, ((0, 0), (0, 0), (pad_t, pad_b), (pad_l, pad_r)),
                      mode="edge")
    return out


if __name__ == "__main__":
    key = jax.random.PRNGKey(0)
    # Small NCHW input consistent with the module's conv-style usage.
    x = jax.random.normal(key, (2, 4, 16, 16), dtype=jnp.float32)

    # Module config: kernel_size=(2, 2), auto_pad=True, fast_imp=False.
    fn = jax.jit(functools.partial(avg_pool2d, kernel_size=(2, 2),
                                   auto_pad=True))
    out = jax.block_until_ready(fn(x))

    ref = _reference(x, kernel_size=(2, 2), auto_pad=True)
    assert out.shape == (2, 4, 16, 16), out.shape
    assert jnp.allclose(out, ref, atol=1e-5, rtol=1e-5), "mismatch vs reference"

    # TODO(synk): fast_imp=True branch (strided subsample + interpolate) not
    # implemented; the module's default inference path (fast_imp=False) is.
    print("KERNEL_OK")
</pallas_src>

<mosaic_0001>
module attributes {stable_mosaic.version = 11 : i64} {
  func.func @_avgpool_kernel(%arg0: i32, %arg1: memref<16x16x8xf32, #tpu.memory_space<vmem>>, %arg2: memref<16x16x8xf32, #tpu.memory_space<vmem>>) attributes {dimension_semantics = [#tpu.dimension_semantics<parallel>], iteration_bounds = array<i64: 1>, scalar_prefetch = 0 : i64, scratch_operands = 0 : i64, tpu.core_type = #tpu.core_type<tc>, window_params = [{transform_indices = @transform_0, window_bounds = array<i64: 16, 16, 8>}, {transform_indices = @transform_1, window_bounds = array<i64: 16, 16, 8>}]} {
    %c0 = arith.constant 0 : index
    %c0_0 = arith.constant 0 : index
    %c0_1 = arith.constant 0 : index
    %0 = vector.load %arg1[%c0, %c0_0, %c0_1] : memref<16x16x8xf32, #tpu.memory_space<vmem>>, vector<16x16x8xf32>
    %1 = vector.extract_strided_slice %0 {offsets = [0, 0, 0], sizes = [16, 15, 8], strides = [1, 1, 1]} : vector<16x16x8xf32> to vector<16x15x8xf32>
    %2 = vector.extract_strided_slice %0 {offsets = [0, 1, 0], sizes = [16, 15, 8], strides = [1, 1, 1]} : vector<16x16x8xf32> to vector<16x15x8xf32>
    %3 = arith.addf %1, %2 : vector<16x15x8xf32>
    %4 = vector.extract_strided_slice %3 {offsets = [0, 0, 0], sizes = [15, 15, 8], strides = [1, 1, 1]} : vector<16x15x8xf32> to vector<15x15x8xf32>
    %5 = vector.extract_strided_slice %3 {offsets = [1, 0, 0], sizes = [15, 15, 8], strides = [1, 1, 1]} : vector<16x15x8xf32> to vector<15x15x8xf32>
    %6 = arith.addf %4, %5 : vector<15x15x8xf32>
    %cst = arith.constant 2.500000e-01 : f32
    %7 = vector.broadcast %cst : f32 to vector<15x15x8xf32>
    %8 = arith.mulf %6, %7 : vector<15x15x8xf32>
    %c0_2 = arith.constant 0 : index
    %c0_3 = arith.constant 0 : index
    %c0_4 = arith.constant 0 : index
    %9 = vector.load %arg2[%c0_2, %c0_3, %c0_4] : memref<16x16x8xf32, #tpu.memory_space<vmem>>, vector<15x15x8xf32>
    tpu.vector_store %arg2[%c0_2, %c0_3, %c0_4], %8 {strides = array<i32>} : memref<16x16x8xf32, #tpu.memory_space<vmem>>, vector<15x15x8xf32>,
    %10 = vector.extract_strided_slice %8 {offsets = [0, 14, 0], sizes = [15, 1, 8], strides = [1, 1, 1]} : vector<15x15x8xf32> to vector<15x1x8xf32>
    %c0_5 = arith.constant 0 : index
    %c15 = arith.constant 15 : index
    %c0_6 = arith.constant 0 : index
    %11 = vector.load %arg2[%c0_5, %c15, %c0_6] : memref<16x16x8xf32, #tpu.memory_space<vmem>>, vector<15x1x8xf32>
    tpu.vector_store %arg2[%c0_5, %c15, %c0_6], %10 {strides = array<i32>} : memref<16x16x8xf32, #tpu.memory_space<vmem>>, vector<15x1x8xf32>,
    %c14 = arith.constant 14 : index
    %c0_7 = arith.constant 0 : index
    %c0_8 = arith.constant 0 : index
    %12 = vector.load %arg2[%c14, %c0_7, %c0_8] : memref<16x16x8xf32, #tpu.memory_space<vmem>>, vector<1x16x8xf32>
    %c15_9 = arith.constant 15 : index
    %c0_10 = arith.constant 0 : index
    %c0_11 = arith.constant 0 : index
    %13 = vector.load %arg2[%c15_9, %c0_10, %c0_11] : memref<16x16x8xf32, #tpu.memory_space<vmem>>, vector<1x16x8xf32>
    tpu.vector_store %arg2[%c15_9, %c0_10, %c0_11], %12 {strides = array<i32>} : memref<16x16x8xf32, #tpu.memory_space<vmem>>, vector<1x16x8xf32>,
    return
  }
  func.func @transform_0(%arg0: i32) -> (i32, i32, i32) {
    %c0_i32 = arith.constant 0 : i32
    %c0_i32_0 = arith.constant 0 : i32
    %c0_i32_1 = arith.constant 0 : i32
    return %c0_i32, %c0_i32_0, %arg0 : i32, i32, i32
  }
  func.func @transform_1(%arg0: i32) -> (i32, i32, i32) {
    %c0_i32 = arith.constant 0 : i32
    %c0_i32_0 = arith.constant 0 : i32
    %c0_i32_1 = arith.constant 0 : i32
    return %c0_i32, %c0_i32_0, %arg0 : i32, i32, i32
  }
}

</mosaic_0001>

<llo_original>
// kernel: avg_pool2d.1
$region0: #{avg_pool2d.1}
  #allocation0 [shape = 'u32[]', space=smem, size = 0x4, offset = 0x4, fixed_abs, tag = 'smem constant byte address 0x4 - core index']
  #allocation1 [shape = 'u32[72,128]{1,0:T(1,128)}', space=vmem, size = 0x9000, scoped, tag = 'internal scratch']
  %s0 = inlined_call_operand.vmem [shape: f32[16,16,8], index: 0, kind: input, shape index: {}]
  %s1 = inlined_call_operand.vmem [shape: f32[16,16,8], index: 1, kind: output, shape index: {}]
  %s2 = sld [smem:[#allocation0]]
  $region14: #{avg_pool2d.1} parent=0
    _
  %s4 = ssub.s32 1, %s2
  %s5 = scalar_select 0, %s4, %s2
  // Predicated region
  $region2: #{avg_pool2d.1} parent=0 // pred_check
    _
  $region3: #{avg_pool2d.1} parent=0 // pred_check_branch
    %7 = sbr.rel (0) target = $region5
  $region4: #{avg_pool2d.1} parent=0 // pred_region
    _
  $region5: #{avg_pool2d.1} parent=0 // pred_fallthru
    _
  %v8 = vld [vmem:[%s0] sm:$0xff]
  %v9 = vld [vmem:[%s0 + $0x8] sm:$0xff]
  %v10 = vld [vmem:[%s0 + $0x10] sm:$0xff]
  %v11 = vld [vmem:[%s0 + $0x18] sm:$0xff]
  %v12 = vld [vmem:[%s0 + $0x20] sm:$0xff]
  %v13 = vld [vmem:[%s0 + $0x28] sm:$0xff]
  %v14 = vld [vmem:[%s0 + $0x30] sm:$0xff]
  %v15 = vld [vmem:[%s0 + $0x38] sm:$0xff]
  %v16 = vld [vmem:[%s0 + $0x40] sm:$0xff]
  %v17 = vld [vmem:[%s0 + $0x48] sm:$0xff]
  %v18 = vld [vmem:[%s0 + $0x50] sm:$0xff]
  %v19 = vld [vmem:[%s0 + $0x58] sm:$0xff]
  %v20 = vld [vmem:[%s0 + $0x60] sm:$0xff]
  %v21 = vld [vmem:[%s0 + $0x68] sm:$0xff]
  %v22 = vld [vmem:[%s0 + $0x70] sm:$0xff]
  %v23 = vld [vmem:[%s0 + $0x78] sm:$0xff]
  %v24 = vld [vmem:[%s0 + $0x80] sm:$0xff]
  %v25 = vld [vmem:[%s0 + $0x88] sm:$0xff]
  %v26 = vld [vmem:[%s0 + $0x90] sm:$0xff]
  %v27 = vld [vmem:[%s0 + $0x98] sm:$0xff]
  %v28 = vld [vmem:[%s0 + $0xa0] sm:$0xff]
  %v29 = vld [vmem:[%s0 + $0xa8] sm:$0xff]
  %v30 = vld [vmem:[%s0 + $0xb0] sm:$0xff]
  %v31 = vld [vmem:[%s0 + $0xb8] sm:$0xff]
  %v32 = vld [vmem:[%s0 + $0xc0] sm:$0xff]
  %v33 = vld [vmem:[%s0 + $0xc8] sm:$0xff]
  %v34 = vld [vmem:[%s0 + $0xd0] sm:$0xff]
  %v35 = vld [vmem:[%s0 + $0xd8] sm:$0xff]
  %v36 = vld [vmem:[%s0 + $0xe0] sm:$0xff]
  %v37 = vld [vmem:[%s0 + $0xe8] sm:$0xff]
  %v38 = vld [vmem:[%s0 + $0xf0] sm:$0xff]
  %v39 = vld [vmem:[%s0 + $0xf8] sm:$0xff]
  %vm72 = vcmask 1046528
  %v73 = vrot.slane %v8, 1
  %v74 = vrot.slane %v9, 1
  %v75 = vsel %vm72, %v73, %v74
  %v76 = vrot.slane %v10, 1
  %v77 = vrot.slane %v11, 1
  %v78 = vsel %vm72, %v76, %v77
  %v79 = vrot.slane %v12, 1
  %v80 = vrot.slane %v13, 1
  %v81 = vsel %vm72, %v79, %v80
  %v82 = vrot.slane %v14, 1
  %v83 = vrot.slane %v15, 1
  %v84 = vsel %vm72, %v82, %v83
  %v85 = vrot.slane %v16, 1
  %v86 = vrot.slane %v17, 1
  %v87 = vsel %vm72, %v85, %v86
  %v88 = vrot.slane %v18, 1
  %v89 = vrot.slane %v19, 1
  %v90 = vsel %vm72, %v88, %v89
  %v91 = vrot.slane %v20, 1
  %v92 = vrot.slane %v21, 1
  %v93 = vsel %vm72, %v91, %v92
  %v94 = vrot.slane %v22, 1
  %v95 = vrot.slane %v23, 1
  %v96 = vsel %vm72, %v94, %v95
  %v97 = vrot.slane %v24, 1
  %v98 = vrot.slane %v25, 1
  %v99 = vsel %vm72, %v97, %v98
  %v100 = vrot.slane %v26, 1
  %v101 = vrot.slane %v27, 1
  %v102 = vsel %vm72, %v100, %v101
  %v103 = vrot.slane %v28, 1
  %v104 = vrot.slane %v29, 1
  %v105 = vsel %vm72, %v103, %v104
  %v106 = vrot.slane %v30, 1
  %v107 = vrot.slane %v31, 1
  %v108 = vsel %vm72, %v106, %v107
  %v109 = vrot.slane %v32, 1
  %v110 = vrot.slane %v33, 1
  %v111 = vsel %vm72, %v109, %v110
  %v112 = vrot.slane %v34, 1
  %v113 = vrot.slane %v35, 1
  %v114 = vsel %vm72, %v112, %v113
  %v115 = vrot.slane %v36, 1
  %v116 = vrot.slane %v37, 1
  %v117 = vsel %vm72, %v115, %v116
  %v118 = vrot.slane %v38, 1
  %v119 = vrot.slane %v39, 1
  %v120 = vsel %vm72, %v118, %v119
  %v153 = vadd.f32 %v8, %v75
  %v154 = vadd.f32 %v9, %v74
  %v155 = vadd.f32 %v10, %v78
  %v156 = vadd.f32 %v11, %v77
  %v157 = vadd.f32 %v12, %v81
  %v158 = vadd.f32 %v13, %v80
  %v159 = vadd.f32 %v14, %v84
  %v160 = vadd.f32 %v15, %v83
  %v161 = vadd.f32 %v16, %v87
  %v162 = vadd.f32 %v17, %v86
  %v163 = vadd.f32 %v18, %v90
  %v164 = vadd.f32 %v19, %v89
  %v165 = vadd.f32 %v20, %v93
  %v166 = vadd.f32 %v21, %v92
  %v167 = vadd.f32 %v22, %v96
  %v168 = vadd.f32 %v23, %v95
  %v169 = vadd.f32 %v24, %v99
  %v170 = vadd.f32 %v25, %v98
  %v171 = vadd.f32 %v26, %v102
  %v172 = vadd.f32 %v27, %v101
  %v173 = vadd.f32 %v28, %v105
  %v174 = vadd.f32 %v29, %v104
  %v175 = vadd.f32 %v30, %v108
  %v176 = vadd.f32 %v31, %v107
  %v177 = vadd.f32 %v32, %v111
  %v178 = vadd.f32 %v33, %v110
  %v179 = vadd.f32 %v34, %v114
  %v180 = vadd.f32 %v35, %v113
  %v181 = vadd.f32 %v36, %v117
  %v182 = vadd.f32 %v37, %v116
  %v183 = vadd.f32 %v38, %v120
  %v184 = vadd.f32 %v39, %v119
  %v185 = vadd.f32 %v153, %v155
  %v186 = vadd.f32 %v154, %v156
  %v187 = vadd.f32 %v155, %v157
  %v188 = vadd.f32 %v156, %v158
  %v189 = vadd.f32 %v157, %v159
  %v190 = vadd.f32 %v158, %v160
  %v191 = vadd.f32 %v159, %v161
  %v192 = vadd.f32 %v160, %v162
  %v193 = vadd.f32 %v161, %v163
  %v194 = vadd.f32 %v162, %v164
  %v195 = vadd.f32 %v163, %v165
  %v196 = vadd.f32 %v164, %v166
  %v197 = vadd.f32 %v165, %v167
  %v198 = vadd.f32 %v166, %v168
  %v199 = vadd.f32 %v167, %v169
  %v200 = vadd.f32 %v168, %v170
  %v201 = vadd.f32 %v169, %v171
  %v202 = vadd.f32 %v170, %v172
  %v203 = vadd.f32 %v171, %v173
  %v204 = vadd.f32 %v172, %v174
  %v205 = vadd.f32 %v173, %v175
  %v206 = vadd.f32 %v174, %v176
  %v207 = vadd.f32 %v175, %v177
  %v208 = vadd.f32 %v176, %v178
  %v209 = vadd.f32 %v177, %v179
  %v210 = vadd.f32 %v178, %v180
  %v211 = vadd.f32 %v179, %v181
  %v212 = vadd.f32 %v180, %v182
  %v213 = vadd.f32 %v181, %v183
  %v214 = vadd.f32 %v182, %v184
  %v215 = vmul.f32 %v185, 0.25
  %v216 = vmul.f32 %v186, 0.25
  %v217 = vmul.f32 %v187, 0.25
  %v218 = vmul.f32 %v188, 0.25
  %v219 = vmul.f32 %v189, 0.25
  %v220 = vmul.f32 %v190, 0.25
  %v221 = vmul.f32 %v191, 0.25
  %v222 = vmul.f32 %v192, 0.25
  %v223 = vmul.f32 %v193, 0.25
  %v224 = vmul.f32 %v194, 0.25
  %v225 = vmul.f32 %v195, 0.25
  %v226 = vmul.f32 %v196, 0.25
  %v227 = vmul.f32 %v197, 0.25
  %v228 = vmul.f32 %v198, 0.25
  %v229 = vmul.f32 %v199, 0.25
  %v230 = vmul.f32 %v200, 0.25
  %v231 = vmul.f32 %v201, 0.25
  %v232 = vmul.f32 %v202, 0.25
  %v233 = vmul.f32 %v203, 0.25
  %v234 = vmul.f32 %v204, 0.25
  %v235 = vmul.f32 %v205, 0.25
  %v236 = vmul.f32 %v206, 0.25
  %v237 = vmul.f32 %v207, 0.25
  %v238 = vmul.f32 %v208, 0.25
  %v239 = vmul.f32 %v209, 0.25
  %v240 = vmul.f32 %v210, 0.25
  %v241 = vmul.f32 %v211, 0.25
  %v242 = vmul.f32 %v212, 0.25
  %v243 = vmul.f32 %v213, 0.25
  %v244 = vmul.f32 %v214, 0.25
  %vm245 = vcmask 64512
  %246 = vst.msk [vmem:[%s1] sm:$0xff] %vm245, %v215
  %vm247 = vcmask 63488
  %248 = vst.msk [vmem:[%s1 + $0x8] sm:$0x7f] %vm247, %v216
  %249 = vst.msk [vmem:[%s1 + $0x10] sm:$0xff] %vm245, %v217
  %250 = vst.msk [vmem:[%s1 + $0x18] sm:$0x7f] %vm247, %v218
  %251 = vst.msk [vmem:[%s1 + $0x20] sm:$0xff] %vm245, %v219
  %252 = vst.msk [vmem:[%s1 + $0x28] sm:$0x7f] %vm247, %v220
  %253 = vst.msk [vmem:[%s1 + $0x30] sm:$0xff] %vm245, %v221
  %254 = vst.msk [vmem:[%s1 + $0x38] sm:$0x7f] %vm247, %v222
  %255 = vst.msk [vmem:[%s1 + $0x40] sm:$0xff] %vm245, %v223
  %256 = vst.msk [vmem:[%s1 + $0x48] sm:$0x7f] %vm247, %v224
  %257 = vst.msk [vmem:[%s1 + $0x50] sm:$0xff] %vm245, %v225
  %258 = vst.msk [vmem:[%s1 + $0x58] sm:$0x7f] %vm247, %v226
  %259 = vst.msk [vmem:[%s1 + $0x60] sm:$0xff] %vm245, %v227
  %260 = vst.msk [vmem:[%s1 + $0x68] sm:$0x7f] %vm247, %v228
  %261 = vst.msk [vmem:[%s1 + $0x70] sm:$0xff] %vm245, %v229
  %262 = vst.msk [vmem:[%s1 + $0x78] sm:$0x7f] %vm247, %v230
  %263 = vst.msk [vmem:[%s1 + $0x80] sm:$0xff] %vm245, %v231
  %264 = vst.msk [vmem:[%s1 + $0x88] sm:$0x7f] %vm247, %v232
  %265 = vst.msk [vmem:[%s1 + $0x90] sm:$0xff] %vm245, %v233
  %266 = vst.msk [vmem:[%s1 + $0x98] sm:$0x7f] %vm247, %v234
  %267 = vst.msk [vmem:[%s1 + $0xa0] sm:$0xff] %vm245, %v235
  %268 = vst.msk [vmem:[%s1 + $0xa8] sm:$0x7f] %vm247, %v236
  %269 = vst.msk [vmem:[%s1 + $0xb0] sm:$0xff] %vm245, %v237
  %270 = vst.msk [vmem:[%s1 + $0xb8] sm:$0x7f] %vm247, %v238
  %271 = vst.msk [vmem:[%s1 + $0xc0] sm:$0xff] %vm245, %v239
  %272 = vst.msk [vmem:[%s1 + $0xc8] sm:$0x7f] %vm247, %v240
  %273 = vst.msk [vmem:[%s1 + $0xd0] sm:$0xff] %vm245, %v241
  %274 = vst.msk [vmem:[%s1 + $0xd8] sm:$0x7f] %vm247, %v242
  %275 = vst.msk [vmem:[%s1 + $0xe0] sm:$0xff] %vm245, %v243
  %276 = vst.msk [vmem:[%s1 + $0xe8] sm:$0x7f] %vm247, %v244
  %vm277 = vcmask 63494
  %278 = vst.msk [vmem:[%s1 + $0x9] sm:$0x40] %vm277, %v216
  %279 = vst.msk [vmem:[%s1 + $0x19] sm:$0x40] %vm277, %v218
  %280 = vst.msk [vmem:[%s1 + $0x29] sm:$0x40] %vm277, %v220
  %281 = vst.msk [vmem:[%s1 + $0x39] sm:$0x40] %vm277, %v222
  %282 = vst.msk [vmem:[%s1 + $0x49] sm:$0x40] %vm277, %v224
  %283 = vst.msk [vmem:[%s1 + $0x59] sm:$0x40] %vm277, %v226
  %284 = vst.msk [vmem:[%s1 + $0x69] sm:$0x40] %vm277, %v228
  %285 = vst.msk [vmem:[%s1 + $0x79] sm:$0x40] %vm277, %v230
  %286 = vst.msk [vmem:[%s1 + $0x89] sm:$0x40] %vm277, %v232
  %287 = vst.msk [vmem:[%s1 + $0x99] sm:$0x40] %vm277, %v234
  %288 = vst.msk [vmem:[%s1 + $0xa9] sm:$0x40] %vm277, %v236
  %289 = vst.msk [vmem:[%s1 + $0xb9] sm:$0x40] %vm277, %v238
  %290 = vst.msk [vmem:[%s1 + $0xc9] sm:$0x40] %vm277, %v240
  %291 = vst.msk [vmem:[%s1 + $0xd9] sm:$0x40] %vm277, %v242
  %292 = vst.msk [vmem:[%s1 + $0xe9] sm:$0x40] %vm277, %v244
  %s293 = scalar_lea.vmem %s1, 224
  %v294 = vld [vmem:[%s293] sm:$0xff]
  %v295 = vld [vmem:[%s293 + $0x8] sm:$0xff]
  %s296 = scalar_lea.vmem %s1, 240
  %297 = vst.msk [vmem:[%s296] sm:$0xff] %vm245, %v294
  %298 = vst.msk [vmem:[%s296 + $0x8] sm:$0xff] %vm245, %v295
  // Predicated region
  $region6: #{avg_pool2d.1} parent=0 // pred_check
    _
  $region7: #{avg_pool2d.1} parent=0 // pred_check_branch
    %300 = sbr.rel (0) target = $region9
  $region8: #{avg_pool2d.1} parent=0 // pred_region
    _
  $region9: #{avg_pool2d.1} parent=0 // pred_fallthru
    _
  // Predicated region
  $region10: #{avg_pool2d.1} parent=0 // pred_check
    _
  $region11: #{avg_pool2d.1} parent=0 // pred_check_branch
    %302 = sbr.rel (0) target = $region13
  $region12: #{avg_pool2d.1} parent=0 // pred_region
    _
  $region13: #{avg_pool2d.1} parent=0 // pred_fallthru
    _

</llo_original>
